<compile_context>
chip_gen: v7x
topology: tpu7x:2x2x1
jax: 0.10.0
libtpu: 0.0.40
codegen_flags: <defaults>
</compile_context>

<pallas_src>
import functools
import math

import jax
import jax.numpy as jnp
import numpy as np
from jax.experimental import pallas as pl
from jax.experimental.pallas import tpu as pltpu


def _round_up(x: int, m: int) -> int:
    return ((x + m - 1) // m) * m


# ---------------------------------------------------------------------------
# Fused sin/cos: shared Cody-Waite range reduction + quadrant select.
# ---------------------------------------------------------------------------
def _split_pi_over_2(n_parts: int = 4, bits: int = 10):
    """Split pi/2 into f32-exact constants; the first n_parts-1 carry at most
    `bits` significant bits, so k * part is exact in f32 for |k| < 2**(24-bits)."""
    parts, rem = [], math.pi / 2.0
    for _ in range(n_parts - 1):
        if rem == 0.0:
            parts.append(0.0)
            continue
        e = math.floor(math.log2(abs(rem)))
        scale = 2.0 ** (e - (bits - 1))
        p = round(rem / scale) * scale          # <= `bits` significant bits, f32-exact
        parts.append(p)
        rem -= p                                # exact in double
    parts.append(rem)
    return tuple(parts)


_PI2_PARTS = _split_pi_over_2()
_TWO_OVER_PI = 2.0 / math.pi
# Cephes single-precision minimax coefficients on [-pi/4, pi/4].
_SIN_C1, _SIN_C2, _SIN_C3 = -1.6666654611e-1, 8.3321608736e-3, -1.9515295891e-4
_COS_C1, _COS_C2, _COS_C3 = 4.166664568298827e-2, -1.388731625493765e-3, 2.443315711809948e-5


def _fast_sincos(x):
    """Return (sin(x), cos(x)) for f32 x with one shared range reduction.

    k = round(x * 2/pi); r = x - k*pi/2 via the 4-part split above (k*part exact
    for |x| <~ 2.5e4); both polynomials evaluated once on r; quadrant (k mod 4)
    swaps / negates the two halves.  All VPU ops; no transcendental expansion.
    """
    k = jnp.floor(x * _TWO_OVER_PI + 0.5)
    r = x
    for p in _PI2_PARTS:
        r = r - k * p
    r2 = r * r
    sin_r = r + r * r2 * (_SIN_C1 + r2 * (_SIN_C2 + r2 * _SIN_C3))
    cos_r = 1.0 - 0.5 * r2 + r2 * r2 * (_COS_C1 + r2 * (_COS_C2 + r2 * _COS_C3))
    q = k.astype(jnp.int32)
    swap = (q & 1) == 1                            # odd quadrant: sin<->cos
    sin_x = jnp.where(swap, cos_r, sin_r)
    cos_x = jnp.where(swap, sin_r, cos_r)
    sin_x = jnp.where((q & 2) == 2, -sin_x, sin_x)
    cos_x = jnp.where(((q + 1) & 2) == 2, -cos_x, cos_x)
    return sin_x, cos_x


# ---------------------------------------------------------------------------
# Kernels.
# ---------------------------------------------------------------------------
def _write_signal(scaled, out_ref, fast):
    nt = scaled.shape[-1]
    if fast:
        sin_v, cos_v = _fast_sincos(scaled)
    else:
        sin_v, cos_v = jnp.sin(scaled), jnp.cos(scaled)
    if nt % 128 == 0:
        # Both halves lane-aligned -> two unmasked slice stores.
        out_ref[:, :nt] = sin_v.astype(out_ref.dtype)
        out_ref[:, nt:] = cos_v.astype(out_ref.dtype)
    else:
        # Single lane-dense full-width store; the concat relayout uses the XLU,
        # keeping the binding VALU slot free (vs. a masked mid-vreg cos store).
        out_ref[...] = jnp.concatenate([sin_v, cos_v], axis=-1).astype(out_ref.dtype)


def _pos_emb_kernel(pos_ref, inv_ref, out_ref, *, fast):
    # pos_ref: (tile_n, 1) f32, inv_ref: (1, nt) f32, out_ref: (tile_n, 2*nt)
    _write_signal(pos_ref[...] * inv_ref[...], out_ref, fast)


def _pos_emb_iota_kernel(inv_ref, out_ref, *, tile_n, fast):
    # seq_length-only path: positions are the global row index, generated in-kernel.
    base = pl.program_id(0) * tile_n
    rows = jax.lax.broadcasted_iota(jnp.int32, (tile_n, 1), 0) + base
    _write_signal(rows.astype(jnp.float32) * inv_ref[...], out_ref, fast)


# ---------------------------------------------------------------------------
# Wrapper.
# ---------------------------------------------------------------------------
def _inv_timescales(embedding_dims, min_timescale, max_timescale):
    num_timescales = embedding_dims // 2
    log_timescale_increment = (math.log(float(max_timescale) / float(min_timescale))
                               / max(num_timescales - 1, 1))
    return (float(min_timescale)
            * jnp.exp(jnp.arange(num_timescales, dtype=jnp.float32)
                      * -log_timescale_increment))


def positional_embedding(embedding_dims,
                         seq_length=None,
                         position=None,
                         min_timescale=1,
                         max_timescale=10000,
                         tile_n=None,
                         out_dtype=jnp.float32,
                         use_fast_sincos=True):
    """JAX/Pallas equivalent of PositionalEmbedding.forward."""
    if position is None:
        assert seq_length is not None
        B, S = 1, int(seq_length)
    else:
        assert position.ndim == 2, position.shape
        B, S = position.shape

    num_timescales = embedding_dims // 2
    if num_timescales == 0:
        signal = jnp.zeros((B, S, 0), out_dtype)
    else:
        width = 2 * num_timescales
        N = B * S
        # bf16/f16 outputs need (16,128) tiles; f32 needs (8,128).
        row_mult = 16 if np.dtype(out_dtype).itemsize < 4 else 8

        if tile_n is None:
            # ~2 MiB of output per grid step (>=~1 MiB tiles reach ~85% of HBM
            # roofline; per-step overhead amortized).  No fixed row cap.
            budget_rows = max(row_mult, (2 << 20) // (width * 4))
            # Keep >=2 grid steps when N allows so both v7x TensorCores get work.
            half = _round_up(-(-N // 2), row_mult)
            tile_n = min(budget_rows, half)
        tile_n = max(row_mult,
                     (min(tile_n, _round_up(N, row_mult)) // row_mult) * row_mult)

        # Edge block is masked by Pallas -> no wrapper pad / post-slice copy.
        grid = (pl.cdiv(N, tile_n),)

        inv_t = _inv_timescales(embedding_dims, min_timescale, max_timescale)[None, :]

        out_shape = jax.ShapeDtypeStruct((N, width), out_dtype)
        out_spec = pl.BlockSpec((tile_n, width), lambda i: (i, 0))
        inv_spec = pl.BlockSpec((1, num_timescales), lambda i: (0, 0))
        cparams = pltpu.CompilerParams(
            dimension_semantics=("parallel",),      # shard grid across v7x's 2 TCs
            vmem_limit_bytes=32 << 20)              # headroom over v5e's 16 MiB default

        if position is None:
            kernel = functools.partial(_pos_emb_iota_kernel, tile_n=tile_n,
                                       fast=use_fast_sincos)
            signal_flat = pl.pallas_call(
                kernel, out_shape=out_shape, grid=grid,
                in_specs=[inv_spec], out_specs=out_spec,
                compiler_params=cparams,
            )(inv_t)
        else:
            pos_flat = position.astype(jnp.float32).reshape(N, 1)
            kernel = functools.partial(_pos_emb_kernel, fast=use_fast_sincos)
            signal_flat = pl.pallas_call(
                kernel, out_shape=out_shape, grid=grid,
                in_specs=[pl.BlockSpec((tile_n, 1), lambda i: (i, 0)), inv_spec],
                out_specs=out_spec,
                compiler_params=cparams,
            )(pos_flat, inv_t)

        signal = signal_flat.reshape(B, S, width)

    # Reproduce torch's F.pad(signal, (0, 0, 0, embedding_dims % 2)) exactly:
    # for odd D this pads the *sequence* axis (torch quirk), not the channel axis.
    pad = embedding_dims % 2
    if pad:
        signal = jnp.pad(signal, ((0, 0), (0, pad), (0, 0)))
    return signal


# ---------------------------------------------------------------------------
# Reference & self-test.
# ---------------------------------------------------------------------------
def _reference_f64(position_f32, inv_f32, embedding_dims):
    """Ground-truth reference: identical f32 argument pipeline (f32 position *
    f32 inv_timescale), sin/cos evaluated in float64."""
    scaled = (np.asarray(position_f32, np.float32)[:, :, None]
              * np.asarray(inv_f32, np.float32)[None, None, :]).astype(np.float64)
    sig = np.concatenate([np.sin(scaled), np.cos(scaled)], axis=2).astype(np.float32)
    pad = embedding_dims % 2
    if pad:
        sig = np.pad(sig, ((0, 0), (0, pad), (0, 0)))
    return sig


if __name__ == "__main__":
    key = jax.random.PRNGKey(0)

    B, S, D = 2, 8, 32
    position = jax.random.randint(key, (B, S), 0, 100).astype(jnp.float32)
    inv_np = np.asarray(_inv_timescales(D, 1, 10000))   # same bits as the kernel input

    # --- fused-sincos path, packed positions.
    out = jax.block_until_ready(positional_embedding(D, position=position))
    assert out.shape == (B, S, D), out.shape
    ref = _reference_f64(np.asarray(position), inv_np, D)
    assert np.allclose(np.asarray(out), ref, atol=1e-5, rtol=0), "mismatch (fast sincos)"

    # --- jnp.sin/jnp.cos fallback path.
    out_fb = jax.block_until_ready(
        positional_embedding(D, position=position, use_fast_sincos=False))
    assert np.allclose(np.asarray(out_fb), ref, atol=2e-5, rtol=0), "mismatch (fallback)"

    # --- seq_length-only path (positions generated in-kernel via iota).
    out2 = jax.block_until_ready(positional_embedding(D, seq_length=S))
    assert out2.shape == (1, S, D), out2.shape
    ref2 = _reference_f64(np.arange(S, dtype=np.float32)[None, :], inv_np, D)
    assert np.allclose(np.asarray(out2), ref2, atol=1e-5, rtol=0), "mismatch (seq_length)"

    # --- multi-step grid with a masked edge block (N=144, tile_n=32 -> 5 steps).
    B3, S3 = 2, 72
    pos3 = jax.random.randint(jax.random.PRNGKey(1), (B3, S3), 0, 1000).astype(jnp.float32)
    out3 = jax.block_until_ready(positional_embedding(D, position=pos3, tile_n=32))
    assert out3.shape == (B3, S3, D), out3.shape
    ref3 = _reference_f64(np.asarray(pos3), inv_np, D)
    assert np.allclose(np.asarray(out3), ref3, atol=1e-4, rtol=0), "mismatch (edge block)"

    print("KERNEL_OK")
</pallas_src>

<mosaic_0001>
module attributes {stable_mosaic.version = 11 : i64} {
  func.func @_pos_emb_kernel(%arg0: i32, %arg1: memref<8x1xf32, #tpu.memory_space<vmem>>, %arg2: memref<1x16xf32, #tpu.memory_space<vmem>>, %arg3: memref<8x32xf32, #tpu.memory_space<vmem>>) attributes {dimension_semantics = [#tpu.dimension_semantics<parallel>], iteration_bounds = array<i64: 2>, scalar_prefetch = 0 : i64, scratch_operands = 0 : i64, tpu.core_type = #tpu.core_type<tc>, window_params = [{transform_indices = @transform_0, window_bounds = array<i64: 8, 1>}, {pipeline_mode = #tpu.pipeline_mode<synchronous>, transform_indices = @transform_1, window_bounds = array<i64: 1, 16>}, {transform_indices = @transform_2, window_bounds = array<i64: 8, 32>}]} {
    %c0 = arith.constant 0 : index
    %c0_0 = arith.constant 0 : index
    %0 = vector.load %arg1[%c0, %c0_0] : memref<8x1xf32, #tpu.memory_space<vmem>>, vector<8x1xf32>
    %c0_1 = arith.constant 0 : index
    %c0_2 = arith.constant 0 : index
    %1 = vector.load %arg2[%c0_1, %c0_2] : memref<1x16xf32, #tpu.memory_space<vmem>>, vector<1x16xf32>
    %2 = vector.broadcast %0 : vector<8x1xf32> to vector<8x16xf32>
    %3 = vector.broadcast %1 : vector<1x16xf32> to vector<8x16xf32>
    %4 = arith.mulf %2, %3 : vector<8x16xf32>
    %cst = arith.constant 0.636619746 : f32
    %5 = vector.broadcast %cst : f32 to vector<8x16xf32>
    %6 = arith.mulf %4, %5 : vector<8x16xf32>
    %cst_3 = arith.constant 5.000000e-01 : f32
    %7 = vector.broadcast %cst_3 : f32 to vector<8x16xf32>
    %8 = arith.addf %6, %7 : vector<8x16xf32>
    %9 = math.floor %8 : vector<8x16xf32>
    %cst_4 = arith.constant 1.5703125 : f32
    %10 = vector.broadcast %cst_4 : f32 to vector<8x16xf32>
    %11 = arith.mulf %9, %10 : vector<8x16xf32>
    %12 = arith.subf %4, %11 : vector<8x16xf32>
    %cst_5 = arith.constant 4.83989716E-4 : f32
    %13 = vector.broadcast %cst_5 : f32 to vector<8x16xf32>
    %14 = arith.mulf %9, %13 : vector<8x16xf32>
    %15 = arith.subf %12, %14 : vector<8x16xf32>
    %cst_6 = arith.constant -1.62981451E-7 : f32
    %16 = vector.broadcast %cst_6 : f32 to vector<8x16xf32>
    %17 = arith.mulf %9, %16 : vector<8x16xf32>
    %18 = arith.subf %15, %17 : vector<8x16xf32>
    %cst_7 = arith.constant 6.07709438E-11 : f32
    %19 = vector.broadcast %cst_7 : f32 to vector<8x16xf32>
    %20 = arith.mulf %9, %19 : vector<8x16xf32>
    %21 = arith.subf %18, %20 : vector<8x16xf32>
    %22 = arith.mulf %21, %21 : vector<8x16xf32>
    %23 = arith.mulf %21, %22 : vector<8x16xf32>
    %cst_8 = arith.constant -1.95152956E-4 : f32
    %24 = vector.broadcast %cst_8 : f32 to vector<8x16xf32>
    %25 = arith.mulf %22, %24 : vector<8x16xf32>
    %cst_9 = arith.constant 0.00833216123 : f32
    %26 = vector.broadcast %cst_9 : f32 to vector<8x16xf32>
    %27 = arith.addf %26, %25 : vector<8x16xf32>
    %28 = arith.mulf %22, %27 : vector<8x16xf32>
    %cst_10 = arith.constant -0.166666552 : f32
    %29 = vector.broadcast %cst_10 : f32 to vector<8x16xf32>
    %30 = arith.addf %29, %28 : vector<8x16xf32>
    %31 = arith.mulf %23, %30 : vector<8x16xf32>
    %32 = arith.addf %21, %31 : vector<8x16xf32>
    %cst_11 = arith.constant 5.000000e-01 : f32
    %33 = vector.broadcast %cst_11 : f32 to vector<8x16xf32>
    %34 = arith.mulf %33, %22 : vector<8x16xf32>
    %cst_12 = arith.constant 1.000000e+00 : f32
    %35 = vector.broadcast %cst_12 : f32 to vector<8x16xf32>
    %36 = arith.subf %35, %34 : vector<8x16xf32>
    %37 = arith.mulf %22, %22 : vector<8x16xf32>
    %cst_13 = arith.constant 2.44331568E-5 : f32
    %38 = vector.broadcast %cst_13 : f32 to vector<8x16xf32>
    %39 = arith.mulf %22, %38 : vector<8x16xf32>
    %cst_14 = arith.constant -0.00138873165 : f32
    %40 = vector.broadcast %cst_14 : f32 to vector<8x16xf32>
    %41 = arith.addf %40, %39 : vector<8x16xf32>
    %42 = arith.mulf %22, %41 : vector<8x16xf32>
    %cst_15 = arith.constant 0.0416666456 : f32
    %43 = vector.broadcast %cst_15 : f32 to vector<8x16xf32>
    %44 = arith.addf %43, %42 : vector<8x16xf32>
    %45 = arith.mulf %37, %44 : vector<8x16xf32>
    %46 = arith.addf %36, %45 : vector<8x16xf32>
    %47 = arith.fptosi %9 : vector<8x16xf32> to vector<8x16xi32>
    %c1_i32 = arith.constant 1 : i32
    %48 = vector.broadcast %c1_i32 : i32 to vector<8x16xi32>
    %49 = arith.andi %47, %48 : vector<8x16xi32>
    %c1_i32_16 = arith.constant 1 : i32
    %50 = vector.broadcast %c1_i32_16 : i32 to vector<8x16xi32>
    %51 = arith.cmpi eq, %49, %50 : vector<8x16xi32>
    %52 = arith.select %51, %46, %32 : vector<8x16xi1>, vector<8x16xf32>
    %53 = arith.select %51, %32, %46 : vector<8x16xi1>, vector<8x16xf32>
    %c2_i32 = arith.constant 2 : i32
    %54 = vector.broadcast %c2_i32 : i32 to vector<8x16xi32>
    %55 = arith.andi %47, %54 : vector<8x16xi32>
    %c2_i32_17 = arith.constant 2 : i32
    %56 = vector.broadcast %c2_i32_17 : i32 to vector<8x16xi32>
    %57 = arith.cmpi eq, %55, %56 : vector<8x16xi32>
    %cst_18 = arith.constant 0.000000e+00 : f32
    %58 = vector.broadcast %cst_18 : f32 to vector<8x16xf32>
    %59 = arith.subf %58, %52 : vector<8x16xf32>
    %60 = arith.select %57, %59, %52 : vector<8x16xi1>, vector<8x16xf32>
    %c1_i32_19 = arith.constant 1 : i32
    %61 = vector.broadcast %c1_i32_19 : i32 to vector<8x16xi32>
    %62 = arith.addi %47, %61 : vector<8x16xi32>
    %c2_i32_20 = arith.constant 2 : i32
    %63 = vector.broadcast %c2_i32_20 : i32 to vector<8x16xi32>
    %64 = arith.andi %62, %63 : vector<8x16xi32>
    %c2_i32_21 = arith.constant 2 : i32
    %65 = vector.broadcast %c2_i32_21 : i32 to vector<8x16xi32>
    %66 = arith.cmpi eq, %64, %65 : vector<8x16xi32>
    %cst_22 = arith.constant 0.000000e+00 : f32
    %67 = vector.broadcast %cst_22 : f32 to vector<8x16xf32>
    %68 = arith.subf %67, %53 : vector<8x16xf32>
    %69 = arith.select %66, %68, %53 : vector<8x16xi1>, vector<8x16xf32>
    %70 = tpu.concatenate %60, %69 in 1 : vector<8x16xf32>, vector<8x16xf32> -> vector<8x32xf32>
    %c0_23 = arith.constant 0 : index
    %c0_24 = arith.constant 0 : index
    %71 = vector.load %arg3[%c0_23, %c0_24] : memref<8x32xf32, #tpu.memory_space<vmem>>, vector<8x32xf32>
    tpu.vector_store %arg3[%c0_23, %c0_24], %70 {strides = array<i32>} : memref<8x32xf32, #tpu.memory_space<vmem>>, vector<8x32xf32>,
    return
  }
  func.func @transform_0(%arg0: i32) -> (i32, i32) {
    %c0_i32 = arith.constant 0 : i32
    %c0_i32_0 = arith.constant 0 : i32
    return %arg0, %c0_i32 : i32, i32
  }
  func.func @transform_1(%arg0: i32) -> (i32, i32) {
    %c0_i32 = arith.constant 0 : i32
    %c0_i32_0 = arith.constant 0 : i32
    %c0_i32_1 = arith.constant 0 : i32
    return %c0_i32, %c0_i32_0 : i32, i32
  }
  func.func @transform_2(%arg0: i32) -> (i32, i32) {
    %c0_i32 = arith.constant 0 : i32
    %c0_i32_0 = arith.constant 0 : i32
    return %arg0, %c0_i32 : i32, i32
  }
}

</mosaic_0001>

<llo_original>
// kernel: tpu_custom_call.1
$region0: #{tpu_custom_call.1}
  #allocation0 [shape = 'u32[]', space=smem, size = 0x4, offset = 0x4, fixed_abs, tag = 'smem constant byte address 0x4 - core index']
  #allocation1 [shape = 'u32[144,128]{1,0:T(1,128)}', space=vmem, size = 0x12000, scoped, tag = 'internal scratch']
  %s0 = inlined_call_operand.vmem [shape: f32[16,1], index: 0, kind: input, shape index: {}]
  %s1 = inlined_call_operand.vmem [shape: f32[1,16], index: 1, kind: input, shape index: {}]
  %s2 = inlined_call_operand.hbm [shape: f32[16,32], index: 2, kind: output, shape index: {}]
  %s3 = sld [smem:[#allocation0]]
  $region41: #{tpu_custom_call.1} parent=0
    _
  %s5 = ssub.s32 1, %s3
  %s6 = scalar_select 0, %s5, %s3
  $region1: #{tpu_custom_call.1} parent=0
    #allocation2 [shape = 'u8[8192]{0}', space=vmem, size = 0x2000, scoped, tag = 'output window, operand 0']
    #allocation3 [shape = 's32[2]{0}', space=sflag, size = 0x8, scoped, tag = 'scoped memory for tpu_custom_call.1']
    %7 = vsyncpa [#allocation3], 0
    %s8 = scalar_lea.sflag [#allocation3], 1
    %9 = vsyncpa %s8, 0
    loop: start=0, step=1, limit=4
    $region2: #{tpu_custom_call.1} parent=1 // loop_pre_header
      _
    $region3: #{tpu_custom_call.1} parent=1 // loop_header
      %s11 = sphi 0, %s15
      %p12 = scmp.ge.s32.totalorder %s11, 4
      %s21 = sphi 0, %s23
      %s24 = sphi 0, %s21
      %s25 = sphi 0, %s24
      %s41 = sphi 0, %s25
      %s45 = sphi 0, %s45
      %s47 = sphi 0, %s45
      %s48 = sphi 0, %s47
      %s62 = sphi 0, %s48
      %s68 = sphi 0, %s70
      %s71 = sphi 0, %s68
      %s72 = sphi 0, %s71
      %s88 = sphi 0, %s72
    $region4: #{tpu_custom_call.1} parent=1 // loop_header_branch
      %14 = sbr.rel (%p12) target = $region8
    $region5: #{tpu_custom_call.1} parent=1 // loop_body
      %s16 = ssub.s32 %s11, 1
      %s17 = ssub.s32 %s11, 2
      %s18 = sadd.s32 %s11, 1
      %s19 = ssub.s32 %s11, %s18
      %p20 = scmp.eq.s32.totalorder %s19, 0
      %s22 = sadd.s32 %s21, 1
      %s23 = scalar_select %p20, %s21, %s22
      %p26 = pneg %p20
      %p27 = scmp.eq.s32.totalorder %s11, 1
      %p28 = por %p26, %p27
      %p29 = scmp.ne.s32.totalorder %s21, %s24
      %p30 = scmp.eq.s32.totalorder %s11, 0
      %p31 = por %p29, %p30
      %p32 = scmp.ne.s32.totalorder %s21, %s24
      %p33 = scmp.eq.s32.totalorder %s16, 1
      %p34 = por %p32, %p33
      %p35 = scmp.ne.s32.totalorder %s24, %s25
      %p36 = scmp.eq.s32.totalorder %s16, 0
      %p37 = por %p35, %p36
      %p38 = scmp.ne.s32.totalorder %s24, %s25
      %p39 = scmp.eq.s32.totalorder %s17, 1
      %p40 = por %p38, %p39
      %p42 = scmp.ne.s32.totalorder %s25, %s41
      %p43 = scmp.eq.s32.totalorder %s17, 0
      %p44 = por %p42, %p43
      %s46 = sadd.s32 %s45, 1
      %p49 = scmp.eq.s32.totalorder %s11, 1
      %p50 = scmp.ne.s32.totalorder %s45, %s47
      %p51 = scmp.eq.s32.totalorder %s11, 0
      %p52 = por %p50, %p51
      %p53 = scmp.ne.s32.totalorder %s45, %s47
      %p54 = scmp.eq.s32.totalorder %s16, 1
      %p55 = por %p53, %p54
      %p56 = scmp.ne.s32.totalorder %s47, %s48
      %p57 = scmp.eq.s32.totalorder %s16, 0
      %p58 = por %p56, %p57
      %p59 = scmp.ne.s32.totalorder %s47, %s48
      %p60 = scmp.eq.s32.totalorder %s17, 1
      %p61 = por %p59, %p60
      %p63 = scmp.ne.s32.totalorder %s48, %s62
      %p64 = scmp.eq.s32.totalorder %s17, 0
      %p65 = por %p63, %p64
      %s66 = ssub.s32 %s11, %s18
      %p67 = scmp.eq.s32.totalorder %s66, 0
      %s69 = sadd.s32 %s68, 1
      %s70 = scalar_select %p67, %s68, %s69
      %p73 = pneg %p67
      %p74 = scmp.eq.s32.totalorder %s11, 1
      %p75 = por %p73, %p74
      %p76 = scmp.ne.s32.totalorder %s68, %s71
      %p77 = scmp.eq.s32.totalorder %s11, 0
      %p78 = por %p76, %p77
      %p79 = scmp.ne.s32.totalorder %s68, %s71
      %p80 = scmp.eq.s32.totalorder %s16, 1
      %p81 = por %p79, %p80
      %p82 = scmp.ne.s32.totalorder %s71, %s72
      %p83 = scmp.eq.s32.totalorder %s16, 0
      %p84 = por %p82, %p83
      %p85 = scmp.ne.s32.totalorder %s71, %s72
      %p86 = scmp.eq.s32.totalorder %s17, 1
      %p87 = por %p85, %p86
      %p89 = scmp.ne.s32.totalorder %s72, %s88
      %p90 = scmp.eq.s32.totalorder %s17, 0
      %p91 = por %p89, %p90
      %p92 = scmp.le.s32.totalorder 1, %s11
      %p93 = scmp.lt.s32.totalorder %s11, 3
      %p94 = pnand %p92, %p93
      %p95 = pneg %p94
      // Predicated region
      $region9: #{tpu_custom_call.1} parent=5 // pred_check
        _
      $region10: #{tpu_custom_call.1} parent=5 // pred_check_branch
        %97 = sbr.rel (%p94) target = $region12
      $region11: #{tpu_custom_call.1} parent=5 // pred_region
        %s98 = ssub.s32 %s11, 1
        // Predicated region
        $region13: #{tpu_custom_call.1} parent=11 // pred_check
          %p99 = pneg %p58
        $region14: #{tpu_custom_call.1} parent=11 // pred_check_branch
          %101 = sbr.rel (%p99) target = $region16
        $region15: #{tpu_custom_call.1} parent=11 // pred_region
          _
        $region16: #{tpu_custom_call.1} parent=11 // pred_fallthru
          _
      $region12: #{tpu_custom_call.1} parent=5 // pred_fallthru
        _
      %p102 = scmp.lt.s32.totalorder %s11, 2
      // Predicated region
      $region17: #{tpu_custom_call.1} parent=5 // pred_check
        %p103 = pneg %p102
      $region18: #{tpu_custom_call.1} parent=5 // pred_check_branch
        %105 = sbr.rel (%p103) target = $region20
      $region19: #{tpu_custom_call.1} parent=5 // pred_region
        // Predicated region
        $region21: #{tpu_custom_call.1} parent=19 // pred_check
          %p106 = pneg %p31
        $region22: #{tpu_custom_call.1} parent=19 // pred_check_branch
          %108 = sbr.rel (%p106) target = $region24
        $region23: #{tpu_custom_call.1} parent=19 // pred_region
          %p109 = scmp.lt.s32.totalorder %s11, 1
          %s110 = scalar_select %p109, %s11, 1
          %s111 = smul.addr %s110, 8
          %s112 = scalar_lea.vmem %s0, %s111
        $region24: #{tpu_custom_call.1} parent=19 // pred_fallthru
          _
      $region20: #{tpu_custom_call.1} parent=5 // pred_fallthru
        _
      %p113 = scmp.le.s32.totalorder 1, %s11
      %p114 = scmp.lt.s32.totalorder %s11, 3
      %p115 = pnand %p113, %p114
      %p116 = pneg %p115
      // Predicated region
      $region25: #{tpu_custom_call.1} parent=5 // pred_check
        _
      $region26: #{tpu_custom_call.1} parent=5 // pred_check_branch
        %118 = sbr.rel (%p115) target = $region28
      $region27: #{tpu_custom_call.1} parent=5 // pred_region
        %s119 = ssub.s32 %s11, 1
        %p120 = scmp.lt.s32.totalorder %s16, 1
        %s121 = scalar_select %p120, %s16, 1
        %s122 = smul.addr %s121, 8
        %s123 = scalar_lea.vmem %s0, %s122
        %p124 = pneg %p37
        %p125 = pneg %p34
        %p126 = pneg %p58
        %p127 = pneg %p55
        %p128 = pneg %p84
        %p129 = pneg %p81
        %s130 = sand.u32 %s71, 1
        %s131 = scalar_lea.sflag [#allocation3], %s130
        %s132 = sand.u32 %s71, 1
        %s133 = smul.addr %s132, 8
        %s134 = scalar_lea.vmem [#allocation2], %s133
        %p135 = scmp.lt.s32.totalorder %s16, 1
        %s136 = scalar_select %p135, %s16, 1
        %s137 = smul.addr %s136, 8
        %s138 = scalar_lea.vmem %s0, %s137
        %v139 = vld [vmem:[%s138] sm:$0xff]
        %v140 = vld [vmem:[%s1] sm:$0x1]
        %142 = vset.pattern.permute.xlu0 0
        %143 = vperm.xlu0 %142, %v139
        %v144 = vpop.permute.xlu0 %143
        %v147 = vlaneseq
        %v148 = vshrl.u32 %v147, 7
        %v149 = vsub.s32 0, %v148
        %v150 = vrot.slane %v140, %v149
        %v152 = vmul.f32 %v144, %v150
        %v153 = vmul.f32 %v152, 0.63661975
        %v154 = vadd.f32 %v153, 0.5
        %v155 = vfloor.f32 %v154
        %v156 = vmul.f32 %v155, 1.5703125
        %v157 = vsub.f32 %v152, %v156
        %v158 = vmul.f32 %v155, 0.00048398972
        %v159 = vsub.f32 %v157, %v158
        %v160 = vmul.f32 %v155, -1.6298145e-07
        %v161 = vsub.f32 %v159, %v160
        %v162 = vmul.f32 %v155, 6.0770944e-11
        %v163 = vsub.f32 %v161, %v162
        %v164 = vmul.f32 %v163, %v163
        %v165 = vmul.f32 %v163, %v164
        %v166 = vmul.f32 %v164, -0.00019515296
        %v167 = vadd.f32 %v166, 0.008332161
        %v168 = vmul.f32 %v164, %v167
        %v169 = vadd.f32 %v168, -0.16666655
        %v170 = vmul.f32 %v165, %v169
        %v171 = vadd.f32 %v163, %v170
        %v172 = vmul.f32 %v164, 0.5
        %v173 = vsub.f32 1.0, %v172
        %v174 = vmul.f32 %v164, %v164
        %v175 = vmul.f32 %v164, 2.4433157e-05
        %v176 = vadd.f32 %v175, -0.0013887316
        %v177 = vmul.f32 %v164, %v176
        %v178 = vadd.f32 %v177, 0.041666646
        %v179 = vmul.f32 %v174, %v178
        %v180 = vadd.f32 %v173, %v179
        %v181 = vcvt.f32.s32.to.zero.pseudo %v155
        %v182 = vand.u32 %v181, 1
        %vm183 = vcmp.eq.s32.totalorder %v182, 1
        %v184 = vsel %vm183, %v180, %v171
        %v185 = vsel %vm183, %v171, %v180
        %v186 = vand.u32 %v181, 2
        %vm187 = vcmp.eq.s32.totalorder %v186, 2
        %v188 = vsub.f32 0.0, %v184
        %v189 = vsel %vm187, %v188, %v184
        %v190 = vadd.s32 %v181, 1
        %v191 = vand.u32 %v190, 2
        %vm192 = vcmp.eq.s32.totalorder %v191, 2
        %v193 = vsub.f32 0.0, %v185
        %v194 = vsel %vm192, %v193, %v185
        %196 = vrot.lane.b32.xlu0 %v194, 16
        %v197 = vpop.permute.xlu0 %196
        %vm199 = vcmask 130048
        %v200 = vsel %vm199, %v189, %v197
        %vm201 = vcmask 261120
        %202 = vst.msk [vmem:[%s134] sm:$0xff] %vm201, %v200
        %s203 = sand.u32 %s71, 1
        %s204 = scalar_lea.sflag [#allocation3], %s203
        %s205 = sand.u32 %s71, 1
        %s206 = smul.addr %s205, 8
        %s207 = scalar_lea.vmem [#allocation2], %s206
        // Predicated region
        $region29: #{tpu_custom_call.1} parent=27 // pred_check
          %p208 = pneg %p81
        $region30: #{tpu_custom_call.1} parent=27 // pred_check_branch
          %210 = sbr.rel (%p208) target = $region32
        $region31: #{tpu_custom_call.1} parent=27 // pred_region
          %s212 = ssub.s32 128, 128
          %213 = vsyncadd %s204, %s212
          %s214 = smul.addr %s16, 128
          %s215 = scalar_lea.hbm %s2, %s214
          %s217 = sshll.u32 %s207, 4
          %s218 = int_to_ptr.vmem [resolvable:$true] %s217
          %220 = dma.vmem_to_hbm [thread:$0]  %s218, 128, %s215, %s204
        $region32: #{tpu_custom_call.1} parent=27 // pred_fallthru
          _
      $region28: #{tpu_custom_call.1} parent=5 // pred_fallthru
        _
      %p221 = scmp.le.s32.totalorder 2, %s11
      // Predicated region
      $region33: #{tpu_custom_call.1} parent=5 // pred_check
        %p222 = pneg %p221
      $region34: #{tpu_custom_call.1} parent=5 // pred_check_branch
        %224 = sbr.rel (%p222) target = $region36
      $region35: #{tpu_custom_call.1} parent=5 // pred_region
        %s225 = ssub.s32 %s11, 2
        // Predicated region
        $region37: #{tpu_custom_call.1} parent=35 // pred_check
          %p226 = pneg %p87
        $region38: #{tpu_custom_call.1} parent=35 // pred_check_branch
          %228 = sbr.rel (%p226) target = $region40
        $region39: #{tpu_custom_call.1} parent=35 // pred_region
          %s229 = sand.u32 %s72, 1
          %s230 = scalar_lea.sflag [#allocation3], %s229
          %s231 = sand.u32 %s72, 1
          %s232 = smul.addr %s231, 8
          %s233 = scalar_lea.vmem [#allocation2], %s232
          %234 = dma.done %s230, 128
        $region40: #{tpu_custom_call.1} parent=35 // pred_fallthru
          _
      $region36: #{tpu_custom_call.1} parent=5 // pred_fallthru
        _
    $region6: #{tpu_custom_call.1} parent=1 // loop_footer
      %s15 = sadd.s32 1, %s11
    $region7: #{tpu_custom_call.1} parent=1 // loop_footer_branch
      %10 = sbr.rel target = $region3
    $region8: #{tpu_custom_call.1} parent=1 // loop_exit
      _
    %235 = vsyncpa [#allocation3], 1
    %s236 = scalar_lea.sflag [#allocation3], 1
    %237 = vsyncpa %s236, 1

</llo_original>
